<compile_context>
chip_gen: v5e
topology: v5e:2x2
jax: 0.10.0
libtpu: 0.0.40
codegen_flags: <defaults>
</compile_context>

<pallas_src>
import functools

import jax
import jax.numpy as jnp
from jax.experimental import pallas as pl
from jax.experimental.pallas import tpu as pltpu


def _residual_kernel(gamma_ref, beta_ref,            # SMEM: norm scale / bias (scalars)
                     x_ref, w_ref, b_ref,            # VMEM: x rows, W column tile, bias tile
                     *rest,                          # [mask_ref,] out_ref
                     eps: float,
                     apply_dropout: bool,
                     mxu_dtype,
                     approx_reciprocal: bool):
    if apply_dropout:
        mask_ref, o_ref = rest
    else:
        (o_ref,) = rest

    x = x_ref[...].astype(jnp.float32)               # (TM, H) — full hidden dim
    h = x.shape[-1]

    # ---- NormalizationLayer: alpha * (x - mean) / (std + eps) + bias -------
    mean = jnp.mean(x, axis=-1, keepdims=True)
    xc = x - mean
    # torch.Tensor.std is unbiased (divides by H - 1).
    var = jnp.sum(xc * xc, axis=-1, keepdims=True) * (1.0 / (h - 1))
    std = jnp.sqrt(var)
    inv = pl.reciprocal(std + eps, approx=approx_reciprocal)   # EUP slot when approx
    normed = gamma_ref[0] * xc * inv + beta_ref[0]

    # ---- sublayer: Linear(H, H) column tile on the MXU (bf16 operands) -----
    y = jnp.dot(normed.astype(mxu_dtype), w_ref[...].astype(mxu_dtype),
                preferred_element_type=jnp.float32)            # (TM, TN) f32
    y = y + b_ref[...].astype(jnp.float32)

    # ---- Dropout(p): precomputed keep-mask already scaled by 1/(1-p) -------
    if apply_dropout:
        y = y * mask_ref[...].astype(jnp.float32)

    # ---- residual add on the matching output columns -----------------------
    tn = o_ref.shape[-1]
    if tn == h:
        x_cols = x
    else:
        x_cols = jax.lax.dynamic_slice_in_dim(x, pl.program_id(1) * tn, tn, axis=1)
    o_ref[...] = (x_cols + y).astype(o_ref.dtype)


def residual_connection(x, w, b, gamma, beta, *,
                        drop_p: float = 0.1,
                        eps: float = 1e-6,
                        train: bool = True,
                        rng=None,
                        row_tile: int = 256,
                        col_tile: int | None = None,
                        mxu_dtype=jnp.bfloat16,
                        approx_reciprocal: bool = True,
                        vmem_limit_bytes: int | None = None):
    """x: (B, S, H) float32.  Returns x + dropout(linear(norm(x)))."""
    B, S, H = x.shape
    rows = B * S

    tm = min(row_tile, rows)
    assert rows % tm == 0, "row count must be a multiple of the row tile"
    tn = H if col_tile is None else min(col_tile, H)
    assert H % tn == 0, "hidden dim must be a multiple of the column tile"

    x2 = x.reshape(rows, H)
    w_c = w.astype(mxu_dtype)                 # halve W bytes (bf16 MXU operand)
    b2 = b.reshape(1, H).astype(jnp.float32)

    apply_dropout = bool(train) and drop_p > 0.0

    in_specs = [
        pl.BlockSpec(memory_space=pltpu.SMEM),                   # gamma (1,)
        pl.BlockSpec(memory_space=pltpu.SMEM),                   # beta  (1,)
        pl.BlockSpec((tm, H), lambda i, j: (i, 0)),              # x rows (full H)
        pl.BlockSpec((H, tn), lambda i, j: (0, j)),              # W column tile
        pl.BlockSpec((1, tn), lambda i, j: (0, j)),              # bias column tile
    ]
    args = [gamma.astype(jnp.float32), beta.astype(jnp.float32), x2, w_c, b2]

    if apply_dropout:
        if rng is None:
            rng = jax.random.PRNGKey(0)
        if drop_p >= 1.0:                      # torch drops everything at p=1
            mask = jnp.zeros((rows, H), dtype=jnp.float32)
        else:
            keep = jax.random.bernoulli(rng, 1.0 - drop_p, (rows, H))
            mask = keep.astype(jnp.float32) * (1.0 / (1.0 - drop_p))
        in_specs.append(pl.BlockSpec((tm, tn), lambda i, j: (i, j)))
        args.append(mask)

    kernel = functools.partial(
        _residual_kernel, eps=eps, apply_dropout=apply_dropout,
        mxu_dtype=mxu_dtype, approx_reciprocal=approx_reciprocal)

    compiler_kwargs = dict(
        # Row axis: independent tiles -> shard across v7x's 2 TensorCores.
        # Column axis: "arbitrary" so the resident x block is reused across j.
        dimension_semantics=("parallel", "arbitrary"))
    if vmem_limit_bytes is not None:
        compiler_kwargs["vmem_limit_bytes"] = vmem_limit_bytes

    out2 = pl.pallas_call(
        kernel,
        out_shape=jax.ShapeDtypeStruct((rows, H), x.dtype),
        grid=(rows // tm, H // tn),
        in_specs=in_specs,
        out_specs=pl.BlockSpec((tm, tn), lambda i, j: (i, j)),
        compiler_params=pltpu.CompilerParams(**compiler_kwargs),
    )(*args)

    return out2.reshape(B, S, H)


if __name__ == "__main__":
    B, S, H = 2, 8, 32   # small demo; real deployments want H a multiple of 128

    key = jax.random.PRNGKey(0)
    kx, kw, kb, kd = jax.random.split(key, 4)

    x = jax.random.normal(kx, (B, S, H), dtype=jnp.float32)

    # NormalizationLayer params (scalar alpha=1, bias=0, like nn.Parameter(ones(1)/zeros(1)))
    gamma = jnp.ones((1,), dtype=jnp.float32)
    beta = jnp.zeros((1,), dtype=jnp.float32)
    # sublayer = Linear(H, H)
    w = jax.random.normal(kw, (H, H), dtype=jnp.float32) * (1.0 / jnp.sqrt(H))
    b = jax.random.normal(kb, (H,), dtype=jnp.float32) * 0.01

    # ---- train-mode run (dropout active) -----------------------------------
    out_train = residual_connection(x, w, b, gamma, beta,
                                    drop_p=0.1, train=True, rng=kd)
    jax.block_until_ready(out_train)
    assert out_train.shape == (B, S, H) and out_train.dtype == jnp.float32
    assert bool(jnp.all(jnp.isfinite(out_train)))

    # ---- pure-JAX reference of the deterministic (dropout-off) path --------
    mean = jnp.mean(x, axis=-1, keepdims=True)
    std = jnp.std(x, axis=-1, keepdims=True, ddof=1)       # unbiased, like torch
    normed = gamma[0] * (x - mean) / (std + 1e-6) + beta[0]
    ref = x + (jnp.einsum("bsh,hk->bsk", normed, w) + b)

    # strict check: f32 MXU operands + exact reciprocal (matches module math)
    out_exact = residual_connection(x, w, b, gamma, beta, drop_p=0.1, train=False,
                                    mxu_dtype=jnp.float32, approx_reciprocal=False)
    assert jnp.allclose(out_exact, ref, atol=1e-4, rtol=1e-4)

    # fast default path (bf16 MXU operands + approx reciprocal): loose tolerance
    out_fast = residual_connection(x, w, b, gamma, beta, drop_p=0.1, train=False)
    assert jnp.allclose(out_fast, ref, atol=5e-2, rtol=5e-2)

    print("KERNEL_OK")
</pallas_src>

<mosaic_0001>
module attributes {stable_mosaic.version = 11 : i64} {
  func.func @_residual_kernel(%arg0: i32, %arg1: i32, %arg2: memref<1xf32, #tpu.memory_space<smem>>, %arg3: memref<1xf32, #tpu.memory_space<smem>>, %arg4: memref<16x32xf32, #tpu.memory_space<vmem>>, %arg5: memref<32x32xbf16, #tpu.memory_space<vmem>>, %arg6: memref<1x32xf32, #tpu.memory_space<vmem>>, %arg7: memref<16x32xf32, #tpu.memory_space<vmem>>, %arg8: memref<16x32xf32, #tpu.memory_space<vmem>>) attributes {dimension_semantics = [#tpu.dimension_semantics<parallel>, #tpu.dimension_semantics<arbitrary>], iteration_bounds = array<i64: 1, 1>, scalar_prefetch = 0 : i64, scratch_operands = 0 : i64, tpu.core_type = #tpu.core_type<tc>, window_params = [{transform_indices = @transform_0, window_bounds = array<i64: 1>}, {transform_indices = @transform_1, window_bounds = array<i64: 1>}, {transform_indices = @transform_2, window_bounds = array<i64: 16, 32>}, {transform_indices = @transform_3, window_bounds = array<i64: 32, 32>}, {transform_indices = @transform_4, window_bounds = array<i64: 1, 32>}, {transform_indices = @transform_5, window_bounds = array<i64: 16, 32>}, {transform_indices = @transform_6, window_bounds = array<i64: 16, 32>}]} {
    %c0 = arith.constant 0 : index
    %c0_0 = arith.constant 0 : index
    %0 = vector.load %arg4[%c0, %c0_0] : memref<16x32xf32, #tpu.memory_space<vmem>>, vector<16x32xf32>
    %cst = arith.constant dense<0.000000e+00> : vector<16xf32>
    %1 = vector.multi_reduction <add>, %0, %cst [1] : vector<16x32xf32> to vector<16xf32>
    %2 = vector.shape_cast %1 : vector<16xf32> to vector<16x1xf32>
    %cst_1 = arith.constant 3.200000e+01 : f32
    %3 = vector.broadcast %cst_1 : f32 to vector<16x1xf32>
    %4 = arith.divf %2, %3 : vector<16x1xf32>
    %5 = vector.broadcast %4 : vector<16x1xf32> to vector<16x32xf32>
    %6 = arith.subf %0, %5 : vector<16x32xf32>
    %7 = arith.mulf %6, %6 : vector<16x32xf32>
    %cst_2 = arith.constant dense<0.000000e+00> : vector<16xf32>
    %8 = vector.multi_reduction <add>, %7, %cst_2 [1] : vector<16x32xf32> to vector<16xf32>
    %9 = vector.shape_cast %8 : vector<16xf32> to vector<16x1xf32>
    %cst_3 = arith.constant 0.0322580636 : f32
    %10 = vector.broadcast %cst_3 : f32 to vector<16x1xf32>
    %11 = arith.mulf %9, %10 : vector<16x1xf32>
    %12 = math.sqrt %11 : vector<16x1xf32>
    %cst_4 = arith.constant 9.99999997E-7 : f32
    %13 = vector.broadcast %cst_4 : f32 to vector<16x1xf32>
    %14 = arith.addf %12, %13 : vector<16x1xf32>
    %15 = tpu.reciprocal %14 {approx = true} : vector<16x1xf32> -> vector<16x1xf32>
    %c0_5 = arith.constant 0 : index
    %16 = memref.load %arg2[%c0_5] : memref<1xf32, #tpu.memory_space<smem>>
    %17 = vector.broadcast %16 : f32 to vector<16x32xf32>
    %18 = arith.mulf %17, %6 : vector<16x32xf32>
    %19 = vector.broadcast %15 : vector<16x1xf32> to vector<16x32xf32>
    %20 = arith.mulf %18, %19 : vector<16x32xf32>
    %c0_6 = arith.constant 0 : index
    %21 = memref.load %arg3[%c0_6] : memref<1xf32, #tpu.memory_space<smem>>
    %22 = vector.broadcast %21 : f32 to vector<16x32xf32>
    %23 = arith.addf %20, %22 : vector<16x32xf32>
    %24 = arith.truncf %23 : vector<16x32xf32> to vector<16x32xbf16>
    %c0_7 = arith.constant 0 : index
    %c0_8 = arith.constant 0 : index
    %25 = vector.load %arg5[%c0_7, %c0_8] : memref<32x32xbf16, #tpu.memory_space<vmem>>, vector<32x32xbf16>
    %cst_9 = arith.constant dense<0.000000e+00> : vector<16x32xf32>
    %26 = tpu.matmul %24, %25, %cst_9 {dimension_numbers = #tpu.dot_dimension_numbers<[1], [0], [0], [1], [0, 0, 1, 1], [], []>} : vector<16x32xbf16>, vector<32x32xbf16>, vector<16x32xf32> -> vector<16x32xf32>
    %c0_10 = arith.constant 0 : index
    %c0_11 = arith.constant 0 : index
    %27 = vector.load %arg6[%c0_10, %c0_11] : memref<1x32xf32, #tpu.memory_space<vmem>>, vector<1x32xf32>
    %28 = vector.broadcast %27 : vector<1x32xf32> to vector<16x32xf32>
    %29 = arith.addf %26, %28 : vector<16x32xf32>
    %c0_12 = arith.constant 0 : index
    %c0_13 = arith.constant 0 : index
    %30 = vector.load %arg7[%c0_12, %c0_13] : memref<16x32xf32, #tpu.memory_space<vmem>>, vector<16x32xf32>
    %31 = arith.mulf %29, %30 : vector<16x32xf32>
    %32 = arith.addf %0, %31 : vector<16x32xf32>
    %c0_14 = arith.constant 0 : index
    %c0_15 = arith.constant 0 : index
    %33 = vector.load %arg8[%c0_14, %c0_15] : memref<16x32xf32, #tpu.memory_space<vmem>>, vector<16x32xf32>
    tpu.vector_store %arg8[%c0_14, %c0_15], %32 {strides = array<i32>} : memref<16x32xf32, #tpu.memory_space<vmem>>, vector<16x32xf32>,
    return
  }
  func.func @transform_0(%arg0: i32, %arg1: i32) -> i32 {
    %c0_i32 = arith.constant 0 : i32
    %c0_i32_0 = arith.constant 0 : i32
    return %c0_i32 : i32
  }
  func.func @transform_1(%arg0: i32, %arg1: i32) -> i32 {
    %c0_i32 = arith.constant 0 : i32
    %c0_i32_0 = arith.constant 0 : i32
    return %c0_i32 : i32
  }
  func.func @transform_2(%arg0: i32, %arg1: i32) -> (i32, i32) {
    %c0_i32 = arith.constant 0 : i32
    %c0_i32_0 = arith.constant 0 : i32
    return %arg0, %c0_i32 : i32, i32
  }
  func.func @transform_3(%arg0: i32, %arg1: i32) -> (i32, i32) {
    %c0_i32 = arith.constant 0 : i32
    %c0_i32_0 = arith.constant 0 : i32
    return %c0_i32, %arg1 : i32, i32
  }
  func.func @transform_4(%arg0: i32, %arg1: i32) -> (i32, i32) {
    %c0_i32 = arith.constant 0 : i32
    %c0_i32_0 = arith.constant 0 : i32
    return %c0_i32, %arg1 : i32, i32
  }
  func.func @transform_5(%arg0: i32, %arg1: i32) -> (i32, i32) {
    %c0_i32 = arith.constant 0 : i32
    return %arg0, %arg1 : i32, i32
  }
  func.func @transform_6(%arg0: i32, %arg1: i32) -> (i32, i32) {
    %c0_i32 = arith.constant 0 : i32
    return %arg0, %arg1 : i32, i32
  }
}

</mosaic_0001>

<llo_original>
// kernel: tpu_custom_call.1
$region0: #{tpu_custom_call.1}
  #allocation0 [shape = 'u32[]', space=smem, size = 0x4, offset = 0x4, fixed_abs, tag = 'smem constant byte address 0x4 - core index']
  #allocation1 [shape = 'u32[72,128]{1,0:T(1,128)}', space=vmem, size = 0x9000, scoped, tag = 'internal scratch']
  #allocation2 [shape = 'f32[1]{0:T(128)S(6)}', space=smem, size = 0x200, scoped, tag = 'scoped memory for tpu_custom_call.1']
  #allocation3 [shape = 'f32[1]{0:T(128)S(6)}', space=smem, size = 0x200, scoped, tag = 'scoped memory for tpu_custom_call.1']
  %s0 = inlined_call_operand.<no memory space> [shape: f32[1], index: 0, kind: input, shape index: {}]
  %s1 = inlined_call_operand.<no memory space> [shape: f32[1], index: 1, kind: input, shape index: {}]
  %s2 = inlined_call_operand.hbm [shape: f32[16,32], index: 2, kind: input, shape index: {}]
  %s3 = inlined_call_operand.hbm [shape: bf16[32,32], index: 3, kind: input, shape index: {}]
  %s4 = inlined_call_operand.vmem [shape: f32[1,32], index: 4, kind: input, shape index: {}]
  %s5 = inlined_call_operand.hbm [shape: f32[16,32], index: 5, kind: input, shape index: {}]
  %s6 = inlined_call_operand.hbm [shape: f32[16,32], index: 6, kind: output, shape index: {}]
  %s7 = sld [smem:[#allocation0]]
  $region46: #{tpu_custom_call.1} parent=0
    _
  %s9 = ssub.s32 1, %s7
  %s10 = scalar_select 0, %s9, %s7
  %11 = sst [smem:[#allocation2]] %s0
  %12 = sst [smem:[#allocation3]] %s1
  $region1: #{tpu_custom_call.1} parent=0
    #allocation4 [shape = 'u8[8192]{0}', space=vmem, size = 0x2000, scoped, tag = 'input window, operand 2, single buffered']
    #allocation5 [shape = 's32[1]{0}', space=sflag, size = 0x4, scoped, tag = 'scoped memory for tpu_custom_call.1']
    #allocation6 [shape = 's32[1]{0}', space=sflag, size = 0x4, scoped, tag = 'scoped memory for tpu_custom_call.1']
    #allocation7 [shape = 'u8[8192]{0}', space=vmem, size = 0x2000, scoped, tag = 'input window, operand 3, single buffered']
    #allocation8 [shape = 's32[1]{0}', space=sflag, size = 0x4, scoped, tag = 'scoped memory for tpu_custom_call.1']
    #allocation9 [shape = 'u8[8192]{0}', space=vmem, size = 0x2000, scoped, tag = 'input window, operand 5, single buffered']
    #allocation10 [shape = 'u8[8192]{0}', space=vmem, size = 0x2000, scoped, tag = 'output window, operand 0, single buffered']
    %13 = vsyncpa [#allocation5], 0
    %14 = vsyncpa [#allocation8], 0
    %15 = vsyncpa [#allocation6], 0
    // Predicated region
    $region2: #{tpu_custom_call.1} parent=1 // pred_check
      _
    $region3: #{tpu_custom_call.1} parent=1 // pred_check_branch
      %17 = sbr.rel (0) target = $region5
    $region4: #{tpu_custom_call.1} parent=1 // pred_region
      _
    $region5: #{tpu_custom_call.1} parent=1 // pred_fallthru
      _
    // Predicated region
    $region6: #{tpu_custom_call.1} parent=1 // pred_check
      _
    $region7: #{tpu_custom_call.1} parent=1 // pred_check_branch
      %19 = sbr.rel (0) target = $region9
    $region8: #{tpu_custom_call.1} parent=1 // pred_region
      _
    $region9: #{tpu_custom_call.1} parent=1 // pred_fallthru
      _
    // Predicated region
    $region10: #{tpu_custom_call.1} parent=1 // pred_check
      _
    $region11: #{tpu_custom_call.1} parent=1 // pred_check_branch
      %21 = sbr.rel (0) target = $region13
    $region12: #{tpu_custom_call.1} parent=1 // pred_region
      %23 = vsyncadd [#allocation5], 0
      %s24 = sshll.u32 %s2, 4
      %s25 = int_to_ptr.hbm [resolvable:$true] %s24
      %s26 = sshll.u32 [#allocation4], 4
      %s27 = int_to_ptr.vmem [resolvable:$true] %s26
      %32 = dma.hbm_to_vmem [thread:$0]  %s25, 256, %s27, [#allocation5], 128, 128, 8
    $region13: #{tpu_custom_call.1} parent=1 // pred_fallthru
      _
    // Predicated region
    $region14: #{tpu_custom_call.1} parent=1 // pred_check
      _
    $region15: #{tpu_custom_call.1} parent=1 // pred_check_branch
      %34 = sbr.rel (0) target = $region17
    $region16: #{tpu_custom_call.1} parent=1 // pred_region
      %36 = vsyncadd [#allocation8], 0
      %s37 = sshll.u32 %s3, 4
      %s38 = int_to_ptr.hbm [resolvable:$true] %s37
      %s39 = sshll.u32 [#allocation7], 4
      %s40 = int_to_ptr.vmem [resolvable:$true] %s39
      %45 = dma.hbm_to_vmem [thread:$0]  %s38, 256, %s40, [#allocation8], 64, 64, 4
    $region17: #{tpu_custom_call.1} parent=1 // pred_fallthru
      _
    // Predicated region
    $region18: #{tpu_custom_call.1} parent=1 // pred_check
      _
    $region19: #{tpu_custom_call.1} parent=1 // pred_check_branch
      %47 = sbr.rel (0) target = $region21
    $region20: #{tpu_custom_call.1} parent=1 // pred_region
      _
    $region21: #{tpu_custom_call.1} parent=1 // pred_fallthru
      _
    // Predicated region
    $region22: #{tpu_custom_call.1} parent=1 // pred_check
      _
    $region23: #{tpu_custom_call.1} parent=1 // pred_check_branch
      %49 = sbr.rel (0) target = $region25
    $region24: #{tpu_custom_call.1} parent=1 // pred_region
      %51 = vsyncadd [#allocation8], 0
      %s52 = sshll.u32 %s5, 4
      %s53 = int_to_ptr.hbm [resolvable:$true] %s52
      %s54 = sshll.u32 [#allocation9], 4
      %s55 = int_to_ptr.vmem [resolvable:$true] %s54
      %60 = dma.hbm_to_vmem [thread:$0]  %s53, 256, %s55, [#allocation8], 128, 128, 8
    $region25: #{tpu_custom_call.1} parent=1 // pred_fallthru
      _
    // Predicated region
    $region26: #{tpu_custom_call.1} parent=1 // pred_check
      _
    $region27: #{tpu_custom_call.1} parent=1 // pred_check_branch
      %62 = sbr.rel (0) target = $region29
    $region28: #{tpu_custom_call.1} parent=1 // pred_region
      %64 = dma.done [#allocation5], 256
    $region29: #{tpu_custom_call.1} parent=1 // pred_fallthru
      _
    // Predicated region
    $region30: #{tpu_custom_call.1} parent=1 // pred_check
      _
    $region31: #{tpu_custom_call.1} parent=1 // pred_check_branch
      %66 = sbr.rel (0) target = $region33
    $region32: #{tpu_custom_call.1} parent=1 // pred_region
      %68 = dma.done [#allocation8], 256
    $region33: #{tpu_custom_call.1} parent=1 // pred_fallthru
      _
    // Predicated region
    $region34: #{tpu_custom_call.1} parent=1 // pred_check
      _
    $region35: #{tpu_custom_call.1} parent=1 // pred_check_branch
      %70 = sbr.rel (0) target = $region37
    $region36: #{tpu_custom_call.1} parent=1 // pred_region
      %72 = dma.done [#allocation8], 256
    $region37: #{tpu_custom_call.1} parent=1 // pred_fallthru
      _
    %v74 = vld [vmem:[#allocation4] sm:$0xff]
    %v75 = vld [vmem:[#allocation4 + $0x8] sm:$0xff]
    %vm76 = vcmask 261120
    %v77 = vsel %vm76, %v74, 0.0
    %78 = vadd.xlane.f32.xlu0 %v77
    %v79 = vpop.xlane.xlu0 %78
    %v80 = vsel %vm76, %v75, 0.0
    %81 = vadd.xlane.f32.xlu0 %v80
    %v82 = vpop.xlane.xlu0 %81
    %v83 = vrcp.pop 32.0
    %v84 = vmul.f32 32.0, %v83
    %v85 = vsub.f32 1.0, %v84
    %v86 = vmul.f32 %v83, %v85
    %v87 = vadd.f32 %v83, %v86
    %vm88 = vweird.f32 %v83
    %v89 = vsel %vm88, %v83, %v87
    %v90 = vmul.f32 %v79, %v89
    %v91 = vmul.f32 %v82, %v89
    %v92 = vsub.f32 %v74, %v90
    %v93 = vsub.f32 %v75, %v91
    %v94 = vmul.f32 %v92, %v92
    %v95 = vmul.f32 %v93, %v93
    %v96 = vsel %vm76, %v94, 0.0
    %97 = vadd.xlane.f32.xlu0 %v96
    %v98 = vpop.xlane.xlu0 %97
    %v99 = vsel %vm76, %v95, 0.0
    %100 = vadd.xlane.f32.xlu0 %v99
    %v101 = vpop.xlane.xlu0 %100
    %v102 = vmul.f32 %v98, 0.032258064
    %v103 = vmul.f32 %v101, 0.032258064
    %v104 = vrsqrt.pop %v102
    %v105 = vmul.f32 %v104, %v102
    %v106 = vmul.f32 %v105, %v104
    %v107 = vmul.f32 0.5, %v106
    %v108 = vsub.f32 1.5, %v107
    %v109 = vmul.f32 %v104, %v108
    %v110 = vmul.f32 %v102, %v109
    %vm111 = vcmp.eq.f32.partialorder %v102, inf
    %v112 = vsel %vm111, %v102, %v110
    %vm113 = vcmp.eq.f32.partialorder %v102, 0.0
    %v114 = vand.u32 %v102, 2147483648
    %v115 = vsel %vm113, %v114, %v112
    %v116 = vrsqrt.pop %v103
    %v117 = vmul.f32 %v116, %v103
    %v118 = vmul.f32 %v117, %v116
    %v119 = vmul.f32 0.5, %v118
    %v120 = vsub.f32 1.5, %v119
    %v121 = vmul.f32 %v116, %v120
    %v122 = vmul.f32 %v103, %v121
    %vm123 = vcmp.eq.f32.partialorder %v103, inf
    %v124 = vsel %vm123, %v103, %v122
    %vm125 = vcmp.eq.f32.partialorder %v103, 0.0
    %v126 = vand.u32 %v103, 2147483648
    %v127 = vsel %vm125, %v126, %v124
    %v128 = vadd.f32 %v115, 1e-06
    %v129 = vadd.f32 %v127, 1e-06
    %v130 = vrcp.pop %v128
    %v131 = vrcp.pop %v129
    %s132 = sld [smem:[#allocation2]]
    %v133 = vstv %s132
    %v134 = vmul.f32 %v133, %v92
    %v135 = vmul.f32 %v133, %v93
    %v136 = vmul.f32 %v134, %v130
    %v137 = vmul.f32 %v135, %v131
    %s138 = sld [smem:[#allocation3]]
    %v139 = vstv %s138
    %v140 = vadd.f32 %v136, %v139
    %v141 = vadd.f32 %v137, %v139
    %v142 = vpack.c.bf16 %v141, %v140
    %v143 = vld [vmem:[#allocation7] sm:$0xf]
    %v144 = vld [vmem:[#allocation7 + $0x4] sm:$0xf]
    %v145 = vld [vmem:[#allocation7 + $0x8] sm:$0xf]
    %v146 = vld [vmem:[#allocation7 + $0xc] sm:$0xf]
    %v147 = vld [vmem:[%s4] sm:$0x1]
    %v149 = vperm.slane %v147, 0
    %v155 = vunpack.c.l.b16 %v143
    %v156 = vunpack.c.l.b16 %v144
    %v157 = vunpack.c.l.b16 %v145
    %v158 = vunpack.c.l.b16 %v146
    %v159 = vpack.c.b16 %v156, %v155
    %v160 = vpack.c.b16 %v158, %v157
    %v164 = vsel %vm76, %v142, 0
    %166 = vmatpush.bf16.msra.mxu0 0
    %167 = vmatpush.bf16.msra.mxu0 0
    %168 = vmatpush.bf16.msra.mxu0 0
    %169 = vmatpush.bf16.msra.mxu0 0
    %170 = vmatpush.bf16.msra.mxu0 0
    %171 = vmatpush.bf16.msra.mxu0 0
    %172 = vmatpush.bf16.msra.mxu0 %v160
    %173 = vmatpush.bf16.msra.mxu0 %v159
    %174 = vmatmul.bf16.gmra.mxu0 %v164
    %v175 = vpop.f32.mrf.mxu0
    %v176 = vadd.f32 %v149, %v175
    %v177 = vpop.f32.mrf.mxu0
    %v178 = vadd.f32 %v149, %v177
    %179 = vdwg.mxu0
    %v180 = vld [vmem:[#allocation9] sm:$0xff]
    %v181 = vld [vmem:[#allocation9 + $0x8] sm:$0xff]
    %v182 = vmul.f32 %v176, %v180
    %v183 = vmul.f32 %v178, %v181
    %v184 = vadd.f32 %v74, %v182
    %v185 = vadd.f32 %v75, %v183
    %186 = vst.msk [vmem:[#allocation10] sm:$0xff] %vm76, %v184
    %187 = vst.msk [vmem:[#allocation10 + $0x8] sm:$0xff] %vm76, %v185
    // Predicated region
    $region38: #{tpu_custom_call.1} parent=1 // pred_check
      _
    $region39: #{tpu_custom_call.1} parent=1 // pred_check_branch
      %189 = sbr.rel (0) target = $region41
    $region40: #{tpu_custom_call.1} parent=1 // pred_region
      %191 = vsyncadd [#allocation6], 0
      %s192 = sshll.u32 [#allocation10], 4
      %s193 = int_to_ptr.vmem [resolvable:$true] %s192
      %s194 = sshll.u32 %s6, 4
      %s195 = int_to_ptr.hbm [resolvable:$true] %s194
      %200 = dma.vmem_to_hbm [thread:$0]  %s193, 256, %s195, [#allocation6], 128, 128, 8
    $region41: #{tpu_custom_call.1} parent=1 // pred_fallthru
      _
    // Predicated region
    $region42: #{tpu_custom_call.1} parent=1 // pred_check
      _
    $region43: #{tpu_custom_call.1} parent=1 // pred_check_branch
      %202 = sbr.rel (0) target = $region45
    $region44: #{tpu_custom_call.1} parent=1 // pred_region
      %204 = dma.done [#allocation6], 256
    $region45: #{tpu_custom_call.1} parent=1 // pred_fallthru
      _
    %205 = vsyncpa [#allocation5], 1
    %206 = vsyncpa [#allocation8], 1
    %207 = vsyncpa [#allocation6], 1

</llo_original>
